<compile_context>
chip_gen: v7x
topology: tpu7x:2x2x1
jax: 0.10.0
libtpu: 0.0.40
codegen_flags: <defaults>
</compile_context>

<pallas_src>
import functools
import math

import jax
import jax.numpy as jnp
from jax.experimental import pallas as pl
from jax.experimental.pallas import tpu as pltpu

LANE = 128
MIB = 1024 * 1024


def _round_up(x, m):
    return (x + m - 1) // m * m


def _pad2(a, rows, cols):
    return jnp.pad(a, ((0, rows - a.shape[0]), (0, cols - a.shape[1])))


def _vmem_capacity_bytes():
    try:
        return int(pltpu.get_tpu_info().vmem_capacity_bytes)
    except Exception:
        return 64 * MIB  # conservative fallback (v7x-sized budget)


def build_adjacency(edge_index, n_pad):
    # A[dst, src] = #edges(src -> dst); bf16 is exact for multiplicities <= 256.
    src, dst = edge_index[0], edge_index[1]
    adj = jnp.zeros((n_pad, n_pad), jnp.float32).at[dst, src].add(1.0)
    return adj.astype(jnp.bfloat16)


def fused_gin_kernel(adj_ref, p_ref, b1a_ref, w1b_ref, b1b_ref,
                     w2a_ref, b2a_ref, w2b_ref, b2b_ref,
                     out_ref, q_ref, *, block_m, adj_resident):
    """grid = (phase, row_tile); phase is the outer (slowest) grid axis.

    phase 0:  h1  = relu(p_i + A_i @ p + b1a)        # p = x @ W1a  (precomputed)
              h   = relu(h1 @ W1b + b1b)             # conv1 + inter-layer ReLU
              q_i = h @ W2a                          # -> bf16 VMEM scratch
    phase 1:  o1    = relu(q_i + A_i @ q + b2a)
              out_i = o1 @ W2b + b2b                 # conv2
    """
    phase = pl.program_id(0)
    i = pl.program_id(1)
    row0 = pl.multiple_of(i * block_m, block_m)

    if adj_resident:
        adj_tile = adj_ref[pl.ds(row0, block_m), :]   # slice of the resident (N, N)
    else:
        adj_tile = adj_ref[...]                       # streamed (block_m, N) slab

    @pl.when(phase == 0)
    def _():
        # sum aggregation on the MXU: bf16 x bf16 operands, f32 accumulation.
        agg = jnp.dot(adj_tile, p_ref[...], preferred_element_type=jnp.float32)
        z1 = p_ref[pl.ds(row0, block_m), :].astype(jnp.float32) + agg + b1a_ref[...]
        h1 = jnp.maximum(z1, 0.0)
        h2 = jnp.dot(h1, w1b_ref[...], preferred_element_type=jnp.float32) + b1b_ref[...]
        h = jnp.maximum(h2, 0.0)                      # inter-layer ReLU fused here
        q = jnp.dot(h, w2a_ref[...], preferred_element_type=jnp.float32)
        q_ref[pl.ds(row0, block_m), :] = q.astype(jnp.bfloat16)
        # Define the (revisited) output block robustly; phase 1 overwrites it.
        out_ref[...] = jnp.zeros_like(out_ref)

    @pl.when(phase == 1)
    def _():
        agg = jnp.dot(adj_tile, q_ref[...], preferred_element_type=jnp.float32)
        z2 = q_ref[pl.ds(row0, block_m), :].astype(jnp.float32) + agg + b2a_ref[...]
        o1 = jnp.maximum(z2, 0.0)
        out_ref[...] = (jnp.dot(o1, w2b_ref[...], preferred_element_type=jnp.float32)
                        + b2b_ref[...])


@functools.partial(jax.jit, static_argnames=("block_m",))
def gin_forward(x, edge_index, params1, params2, *, block_m=128):
    assert block_m % 16 == 0  # bf16 sublane packing on row slices
    n, f_in = x.shape
    w1a, b1a, w1b, b1b = params1
    w2a, b2a, w2b, b2b = params2
    hidden = w1b.shape[1]
    n_cls = w2b.shape[1]

    # Lane-dense padding; node axis padded to a multiple of lcm(block_m, 128) so the
    # aggregation K-dim / adjacency lane dim is 128-aligned and tiles evenly.
    node_mult = block_m * LANE // math.gcd(block_m, LANE)
    n_pad = _round_up(n, node_mult)
    f_pad = _round_up(f_in, LANE)
    h_pad = _round_up(hidden, LANE)
    c_pad = _round_up(n_cls, LANE)

    adj = build_adjacency(edge_index, n_pad)
    x_p = _pad2(x, n_pad, f_pad)
    w1a_p, b1a_p = _pad2(w1a, f_pad, h_pad), _pad2(b1a, 1, h_pad)
    w1b_p, b1b_p = _pad2(w1b, h_pad, h_pad), _pad2(b1b, 1, h_pad)
    w2a_p, b2a_p = _pad2(w2a, h_pad, h_pad), _pad2(b2a, 1, h_pad)
    w2b_p, b2b_p = _pad2(w2b, h_pad, c_pad), _pad2(b2b, 1, c_pad)

    # Project-then-aggregate: p = x @ W1a done once outside the kernel (bias added
    # in-kernel AFTER aggregation, which keeps the identity exact).
    p = jnp.dot(x_p, w1a_p, preferred_element_type=jnp.float32).astype(jnp.bfloat16)

    n_tiles = n_pad // block_m
    grid = (2, n_tiles)

    # ---- VMEM budgeting (per-generation capacity; residents single-buffered) ----
    cap = _vmem_capacity_bytes()
    weight_bytes = 4 * (w1b_p.size + w2a_p.size + w2b_p.size
                        + b1a_p.size + b1b_p.size + b2a_p.size + b2b_p.size)
    resident_bytes = p.size * 2 + weight_bytes          # bf16 p + f32 weights/biases
    scratch_bytes = n_pad * h_pad * 2                   # q scratch (bf16)
    out_bytes = 2 * block_m * c_pad * 4                 # double-buffered output block
    adj_full_bytes = n_pad * n_pad * 2
    adj_slab_bytes = 2 * block_m * n_pad * 2            # double-buffered streamed slab

    # Adjacency residency halves the dominant HBM stream (A read once, not twice).
    adj_resident = (adj_full_bytes + resident_bytes + scratch_bytes + out_bytes
                    <= int(0.55 * cap))
    adj_bytes = adj_full_bytes if adj_resident else adj_slab_bytes

    required = adj_bytes + resident_bytes + scratch_bytes + out_bytes
    vmem_limit = int(min(max(2 * required + 8 * MIB, 32 * MIB), int(0.8 * cap)))
    vmem_limit = int(max(vmem_limit, required + 8 * MIB))

    resident_map = lambda ph, i: (0, 0)   # fetched once, stays VMEM-resident

    def res_spec(shape):
        return pl.BlockSpec(shape, resident_map, pipeline_mode=pl.Buffered(1))

    if adj_resident:
        adj_spec = pl.BlockSpec((n_pad, n_pad), resident_map,
                                pipeline_mode=pl.Buffered(1))
    else:
        adj_spec = pl.BlockSpec((block_m, n_pad), lambda ph, i: (i, 0))

    flops = (2 * 2 * n_pad * n_pad * h_pad                       # two aggregations
             + 2 * n_pad * (2 * h_pad * h_pad + h_pad * c_pad))  # in-kernel MLP matmuls
    bytes_accessed = ((1 if adj_resident else 2) * adj.size * 2
                      + p.size * 2 + n_pad * c_pad * 4 + weight_bytes)

    out_padded = pl.pallas_call(
        functools.partial(fused_gin_kernel, block_m=block_m,
                          adj_resident=adj_resident),
        out_shape=jax.ShapeDtypeStruct((n_pad, c_pad), jnp.float32),
        grid_spec=pltpu.PrefetchScalarGridSpec(
            num_scalar_prefetch=0,
            grid=grid,
            in_specs=[
                adj_spec,                       # A (bf16), resident or streamed slab
                res_spec((n_pad, h_pad)),       # p = x @ W1a (bf16)
                res_spec((1, h_pad)),           # b1a
                res_spec((h_pad, h_pad)),       # w1b
                res_spec((1, h_pad)),           # b1b
                res_spec((h_pad, h_pad)),       # w2a
                res_spec((1, h_pad)),           # b2a
                res_spec((h_pad, c_pad)),       # w2b
                res_spec((1, c_pad)),           # b2b
            ],
            out_specs=pl.BlockSpec((block_m, c_pad), lambda ph, i: (i, 0)),
            scratch_shapes=[pltpu.VMEM((n_pad, h_pad), jnp.bfloat16)],   # q
        ),
        compiler_params=pltpu.CompilerParams(
            # Row axis must stay "arbitrary": phase 1 reads the full q scratch that
            # every phase-0 row tile writes, so the grid runs sequentially.
            dimension_semantics=("arbitrary", "arbitrary"),
            vmem_limit_bytes=vmem_limit,
        ),
        cost_estimate=pl.CostEstimate(flops=int(flops), transcendentals=0,
                                      bytes_accessed=int(bytes_accessed)),
    )(adj, p, b1a_p, w1b_p, b1b_p, w2a_p, b2a_p, w2b_p, b2b_p)

    return out_padded[:n, :n_cls]


def gin_reference(x, edge_index, params1, params2):
    """Pure-JAX f32 reference (PyG GINConv, eps=0, sum aggregation)."""
    n = x.shape[0]
    w1a, b1a, w1b, b1b = params1
    w2a, b2a, w2b, b2b = params2
    adj = jnp.zeros((n, n), jnp.float32).at[edge_index[1], edge_index[0]].add(1.0)

    def mlp(z, wa, ba, wb, bb):
        return jnp.maximum(z @ wa + ba, 0.0) @ wb + bb

    h = jnp.maximum(mlp(x + adj @ x, w1a, b1a, w1b, b1b), 0.0)
    return mlp(h + adj @ h, w2a, b2a, w2b, b2b)


def init_params(key, input_dim, hidden_dim, num_classes):
    # Deterministic synthetic parameters, stored as (in, out) so the kernel computes
    # x @ W + b (equivalent to PyTorch's x @ W.T + b with W=(out,in)).
    ks = jax.random.split(key, 8)
    scale = 0.1

    def lin(k_w, k_b, d_in, d_out):
        w = scale * jax.random.normal(k_w, (d_in, d_out), dtype=jnp.float32)
        b = scale * jax.random.normal(k_b, (1, d_out), dtype=jnp.float32)
        return w, b

    w1a, b1a = lin(ks[0], ks[1], input_dim, hidden_dim)
    w1b, b1b = lin(ks[2], ks[3], hidden_dim, hidden_dim)
    w2a, b2a = lin(ks[4], ks[5], hidden_dim, hidden_dim)
    w2b, b2b = lin(ks[6], ks[7], hidden_dim, num_classes)
    return (w1a, b1a, w1b, b1b), (w2a, b2a, w2b, b2b)


if __name__ == "__main__":
    key = jax.random.PRNGKey(0)
    k_x, k_e, k_p = jax.random.split(key, 3)

    num_nodes = 48
    input_dim = 16
    hidden_dim = 32
    num_classes = 8
    num_edges = 128

    x = jax.random.normal(k_x, (num_nodes, input_dim), dtype=jnp.float32)
    edge_index = jax.random.randint(k_e, (2, num_edges), 0, num_nodes,
                                    dtype=jnp.int32)
    params1, params2 = init_params(k_p, input_dim, hidden_dim, num_classes)

    # block_m=16 so the small demo still exercises the (phase, row_tile) grid.
    out = gin_forward(x, edge_index, params1, params2, block_m=16)
    out = jax.block_until_ready(out)

    assert out.shape == (num_nodes, num_classes)
    assert out.dtype == jnp.float32
    assert bool(jnp.all(jnp.isfinite(out)))

    # Loose tolerance: p / q / A are held in bf16 for the aggregation MXU inputs.
    ref = gin_reference(x, edge_index, params1, params2)
    assert bool(jnp.allclose(out, ref, atol=5e-2, rtol=5e-2))

    print("KERNEL_OK")
</pallas_src>

<mosaic_0001>
module attributes {stable_mosaic.version = 11 : i64} {
  func.func private @main(%arg0: i32) attributes {dimension_semantics = [#tpu.dimension_semantics<core_parallel>], iteration_bounds = array<i64: 2>, tpu.core_type = #tpu.core_type<sc_scalar_subcore>, window_params = []} {
    return
  }
}

module attributes {stable_mosaic.version = 11 : i64} {
  func.func private @main(%arg0: i32) attributes {dimension_semantics = [#tpu.dimension_semantics<core_parallel>], iteration_bounds = array<i64: 2>, tpu.core_type = #tpu.core_type<sc_scalar_subcore>, window_params = []} {
    return
  }
}

module attributes {stable_mosaic.version = 11 : i64} {
  func.func @fused_gin_kernel(%arg0: i32, %arg1: i32, %arg2: memref<128x128xbf16, #tpu.memory_space<vmem>>, %arg3: memref<128x128xbf16, #tpu.memory_space<vmem>>, %arg4: memref<1x128xf32, #tpu.memory_space<vmem>>, %arg5: memref<128x128xf32, #tpu.memory_space<vmem>>, %arg6: memref<1x128xf32, #tpu.memory_space<vmem>>, %arg7: memref<128x128xf32, #tpu.memory_space<vmem>>, %arg8: memref<1x128xf32, #tpu.memory_space<vmem>>, %arg9: memref<128x128xf32, #tpu.memory_space<vmem>>, %arg10: memref<1x128xf32, #tpu.memory_space<vmem>>, %arg11: memref<16x128xf32, #tpu.memory_space<vmem>>, %arg12: memref<128x128xbf16, #tpu.memory_space<vmem>>) attributes {dimension_semantics = [#tpu.dimension_semantics<arbitrary>, #tpu.dimension_semantics<arbitrary>], iteration_bounds = array<i64: 2, 8>, scalar_prefetch = 0 : i64, scratch_operands = 1 : i64, tpu.core_type = #tpu.core_type<tc>, window_params = [{pipeline_mode = #tpu.pipeline_mode<synchronous>, transform_indices = @transform_0, window_bounds = array<i64: 128, 128>}, {pipeline_mode = #tpu.pipeline_mode<synchronous>, transform_indices = @transform_1, window_bounds = array<i64: 128, 128>}, {pipeline_mode = #tpu.pipeline_mode<synchronous>, transform_indices = @transform_2, window_bounds = array<i64: 1, 128>}, {pipeline_mode = #tpu.pipeline_mode<synchronous>, transform_indices = @transform_3, window_bounds = array<i64: 128, 128>}, {pipeline_mode = #tpu.pipeline_mode<synchronous>, transform_indices = @transform_4, window_bounds = array<i64: 1, 128>}, {pipeline_mode = #tpu.pipeline_mode<synchronous>, transform_indices = @transform_5, window_bounds = array<i64: 128, 128>}, {pipeline_mode = #tpu.pipeline_mode<synchronous>, transform_indices = @transform_6, window_bounds = array<i64: 1, 128>}, {pipeline_mode = #tpu.pipeline_mode<synchronous>, transform_indices = @transform_7, window_bounds = array<i64: 128, 128>}, {pipeline_mode = #tpu.pipeline_mode<synchronous>, transform_indices = @transform_8, window_bounds = array<i64: 1, 128>}, {transform_indices = @transform_9, window_bounds = array<i64: 16, 128>}]} {
    %c16_i32 = arith.constant 16 : i32
    %0 = arith.muli %arg1, %c16_i32 : i32
    %1 = tpu.assume_multiple %0, 16 : i32
    %2 = arith.index_cast %1 : i32 to index
    %c0 = arith.constant 0 : index
    %3 = vector.load %arg2[%2, %c0] : memref<128x128xbf16, #tpu.memory_space<vmem>>, vector<16x128xbf16>
    %c0_i32 = arith.constant 0 : i32
    %4 = arith.cmpi eq, %arg0, %c0_i32 : i32
    %5 = arith.extui %4 : i1 to i32
    %c0_i32_0 = arith.constant 0 : i32
    %6 = arith.cmpi ne, %5, %c0_i32_0 : i32
    scf.if %6 {
      %c0_2 = arith.constant 0 : index
      %c0_3 = arith.constant 0 : index
      %10 = vector.load %arg3[%c0_2, %c0_3] : memref<128x128xbf16, #tpu.memory_space<vmem>>, vector<128x128xbf16>
      %cst = arith.constant dense<0.000000e+00> : vector<16x128xf32>
      %11 = tpu.matmul %3, %10, %cst {dimension_numbers = #tpu.dot_dimension_numbers<[1], [0], [0], [1], [0, 0, 1, 1], [], []>} : vector<16x128xbf16>, vector<128x128xbf16>, vector<16x128xf32> -> vector<16x128xf32>
      %12 = arith.index_cast %1 : i32 to index
      %c0_4 = arith.constant 0 : index
      %13 = vector.load %arg3[%12, %c0_4] : memref<128x128xbf16, #tpu.memory_space<vmem>>, vector<16x128xbf16>
      %14 = arith.extf %13 : vector<16x128xbf16> to vector<16x128xf32>
      %15 = arith.addf %14, %11 : vector<16x128xf32>
      %c0_5 = arith.constant 0 : index
      %c0_6 = arith.constant 0 : index
      %16 = vector.load %arg4[%c0_5, %c0_6] : memref<1x128xf32, #tpu.memory_space<vmem>>, vector<1x128xf32>
      %17 = vector.broadcast %16 : vector<1x128xf32> to vector<16x128xf32>
      %18 = arith.addf %15, %17 : vector<16x128xf32>
      %cst_7 = arith.constant 0.000000e+00 : f32
      %19 = vector.broadcast %cst_7 : f32 to vector<16x128xf32>
      %20 = arith.maximumf %18, %19 : vector<16x128xf32>
      %c0_8 = arith.constant 0 : index
      %c0_9 = arith.constant 0 : index
      %21 = vector.load %arg5[%c0_8, %c0_9] : memref<128x128xf32, #tpu.memory_space<vmem>>, vector<128x128xf32>
      %cst_10 = arith.constant dense<0.000000e+00> : vector<16x128xf32>
      %22 = tpu.matmul %20, %21, %cst_10 {dimension_numbers = #tpu.dot_dimension_numbers<[1], [0], [0], [1], [0, 0, 1, 1], [], []>} : vector<16x128xf32>, vector<128x128xf32>, vector<16x128xf32> -> vector<16x128xf32>
      %c0_11 = arith.constant 0 : index
      %c0_12 = arith.constant 0 : index
      %23 = vector.load %arg6[%c0_11, %c0_12] : memref<1x128xf32, #tpu.memory_space<vmem>>, vector<1x128xf32>
      %24 = vector.broadcast %23 : vector<1x128xf32> to vector<16x128xf32>
      %25 = arith.addf %22, %24 : vector<16x128xf32>
      %cst_13 = arith.constant 0.000000e+00 : f32
      %26 = vector.broadcast %cst_13 : f32 to vector<16x128xf32>
      %27 = arith.maximumf %25, %26 : vector<16x128xf32>
      %c0_14 = arith.constant 0 : index
      %c0_15 = arith.constant 0 : index
      %28 = vector.load %arg7[%c0_14, %c0_15] : memref<128x128xf32, #tpu.memory_space<vmem>>, vector<128x128xf32>
      %cst_16 = arith.constant dense<0.000000e+00> : vector<16x128xf32>
      %29 = tpu.matmul %27, %28, %cst_16 {dimension_numbers = #tpu.dot_dimension_numbers<[1], [0], [0], [1], [0, 0, 1, 1], [], []>} : vector<16x128xf32>, vector<128x128xf32>, vector<16x128xf32> -> vector<16x128xf32>
      %30 = arith.truncf %29 : vector<16x128xf32> to vector<16x128xbf16>
      %31 = arith.index_cast %1 : i32 to index
      %c0_17 = arith.constant 0 : index
      %32 = vector.load %arg12[%31, %c0_17] : memref<128x128xbf16, #tpu.memory_space<vmem>>, vector<16x128xbf16>
      tpu.vector_store %arg12[%31, %c0_17], %30 {strides = array<i32>} : memref<128x128xbf16, #tpu.memory_space<vmem>>, vector<16x128xbf16>,
      %cst_18 = arith.constant 0.000000e+00 : f32
      %33 = vector.broadcast %cst_18 : f32 to vector<16x128xf32>
      %c0_19 = arith.constant 0 : index
      %c0_20 = arith.constant 0 : index
      %34 = vector.load %arg11[%c0_19, %c0_20] : memref<16x128xf32, #tpu.memory_space<vmem>>, vector<16x128xf32>
      tpu.vector_store %arg11[%c0_19, %c0_20], %33 {strides = array<i32>} : memref<16x128xf32, #tpu.memory_space<vmem>>, vector<16x128xf32>,
    } else {
    }
    %c1_i32 = arith.constant 1 : i32
    %7 = arith.cmpi eq, %arg0, %c1_i32 : i32
    %8 = arith.extui %7 : i1 to i32
    %c0_i32_1 = arith.constant 0 : i32
    %9 = arith.cmpi ne, %8, %c0_i32_1 : i32
    scf.if %9 {
      %c0_2 = arith.constant 0 : index
      %c0_3 = arith.constant 0 : index
      %10 = vector.load %arg12[%c0_2, %c0_3] : memref<128x128xbf16, #tpu.memory_space<vmem>>, vector<128x128xbf16>
      %cst = arith.constant dense<0.000000e+00> : vector<16x128xf32>
      %11 = tpu.matmul %3, %10, %cst {dimension_numbers = #tpu.dot_dimension_numbers<[1], [0], [0], [1], [0, 0, 1, 1], [], []>} : vector<16x128xbf16>, vector<128x128xbf16>, vector<16x128xf32> -> vector<16x128xf32>
      %12 = arith.index_cast %1 : i32 to index
      %c0_4 = arith.constant 0 : index
      %13 = vector.load %arg12[%12, %c0_4] : memref<128x128xbf16, #tpu.memory_space<vmem>>, vector<16x128xbf16>
      %14 = arith.extf %13 : vector<16x128xbf16> to vector<16x128xf32>
      %15 = arith.addf %14, %11 : vector<16x128xf32>
      %c0_5 = arith.constant 0 : index
      %c0_6 = arith.constant 0 : index
      %16 = vector.load %arg8[%c0_5, %c0_6] : memref<1x128xf32, #tpu.memory_space<vmem>>, vector<1x128xf32>
      %17 = vector.broadcast %16 : vector<1x128xf32> to vector<16x128xf32>
      %18 = arith.addf %15, %17 : vector<16x128xf32>
      %cst_7 = arith.constant 0.000000e+00 : f32
      %19 = vector.broadcast %cst_7 : f32 to vector<16x128xf32>
      %20 = arith.maximumf %18, %19 : vector<16x128xf32>
      %c0_8 = arith.constant 0 : index
      %c0_9 = arith.constant 0 : index
      %21 = vector.load %arg9[%c0_8, %c0_9] : memref<128x128xf32, #tpu.memory_space<vmem>>, vector<128x128xf32>
      %cst_10 = arith.constant dense<0.000000e+00> : vector<16x128xf32>
      %22 = tpu.matmul %20, %21, %cst_10 {dimension_numbers = #tpu.dot_dimension_numbers<[1], [0], [0], [1], [0, 0, 1, 1], [], []>} : vector<16x128xf32>, vector<128x128xf32>, vector<16x128xf32> -> vector<16x128xf32>
      %c0_11 = arith.constant 0 : index
      %c0_12 = arith.constant 0 : index
      %23 = vector.load %arg10[%c0_11, %c0_12] : memref<1x128xf32, #tpu.memory_space<vmem>>, vector<1x128xf32>
      %24 = vector.broadcast %23 : vector<1x128xf32> to vector<16x128xf32>
      %25 = arith.addf %22, %24 : vector<16x128xf32>
      %c0_13 = arith.constant 0 : index
      %c0_14 = arith.constant 0 : index
      %26 = vector.load %arg11[%c0_13, %c0_14] : memref<16x128xf32, #tpu.memory_space<vmem>>, vector<16x128xf32>
      tpu.vector_store %arg11[%c0_13, %c0_14], %25 {strides = array<i32>} : memref<16x128xf32, #tpu.memory_space<vmem>>, vector<16x128xf32>,
    } else {
    }
    return
  }
  func.func @transform_0(%arg0: i32, %arg1: i32) -> (i32, i32) {
    %c0_i32 = arith.constant 0 : i32
    %c0_i32_0 = arith.constant 0 : i32
    %c0_i32_1 = arith.constant 0 : i32
    return %c0_i32, %c0_i32_0 : i32, i32
  }
  func.func @transform_1(%arg0: i32, %arg1: i32) -> (i32, i32) {
    %c0_i32 = arith.constant 0 : i32
    %c0_i32_0 = arith.constant 0 : i32
    %c0_i32_1 = arith.constant 0 : i32
    return %c0_i32, %c0_i32_0 : i32, i32
  }
  func.func @transform_2(%arg0: i32, %arg1: i32) -> (i32, i32) {
    %c0_i32 = arith.constant 0 : i32
    %c0_i32_0 = arith.constant 0 : i32
    %c0_i32_1 = arith.constant 0 : i32
    return %c0_i32, %c0_i32_0 : i32, i32
  }
  func.func @transform_3(%arg0: i32, %arg1: i32) -> (i32, i32) {
    %c0_i32 = arith.constant 0 : i32
    %c0_i32_0 = arith.constant 0 : i32
    %c0_i32_1 = arith.constant 0 : i32
    return %c0_i32, %c0_i32_0 : i32, i32
  }
  func.func @transform_4(%arg0: i32, %arg1: i32) -> (i32, i32) {
    %c0_i32 = arith.constant 0 : i32
    %c0_i32_0 = arith.constant 0 : i32
    %c0_i32_1 = arith.constant 0 : i32
    return %c0_i32, %c0_i32_0 : i32, i32
  }
  func.func @transform_5(%arg0: i32, %arg1: i32) -> (i32, i32) {
    %c0_i32 = arith.constant 0 : i32
    %c0_i32_0 = arith.constant 0 : i32
    %c0_i32_1 = arith.constant 0 : i32
    return %c0_i32, %c0_i32_0 : i32, i32
  }
  func.func @transform_6(%arg0: i32, %arg1: i32) -> (i32, i32) {
    %c0_i32 = arith.constant 0 : i32
    %c0_i32_0 = arith.constant 0 : i32
    %c0_i32_1 = arith.constant 0 : i32
    return %c0_i32, %c0_i32_0 : i32, i32
  }
  func.func @transform_7(%arg0: i32, %arg1: i32) -> (i32, i32) {
    %c0_i32 = arith.constant 0 : i32
    %c0_i32_0 = arith.constant 0 : i32
    %c0_i32_1 = arith.constant 0 : i32
    return %c0_i32, %c0_i32_0 : i32, i32
  }
  func.func @transform_8(%arg0: i32, %arg1: i32) -> (i32, i32) {
    %c0_i32 = arith.constant 0 : i32
    %c0_i32_0 = arith.constant 0 : i32
    %c0_i32_1 = arith.constant 0 : i32
    return %c0_i32, %c0_i32_0 : i32, i32
  }
  func.func @transform_9(%arg0: i32, %arg1: i32) -> (i32, i32) {
    %c0_i32 = arith.constant 0 : i32
    %c0_i32_0 = arith.constant 0 : i32
    return %arg1, %c0_i32 : i32, i32
  }
}

</mosaic_0001>

<llo_original>
// kernel: gin_forward.1
$region0: #{gin_forward.1}
  #allocation0 [shape = 'u32[]', space=smem, size = 0x4, offset = 0x4, fixed_abs, tag = 'smem constant byte address 0x4 - core index']
  #allocation1 [shape = 'u32[144,128]{1,0:T(1,128)}', space=vmem, size = 0x12000, scoped, tag = 'internal scratch']
  #allocation2 [shape = 'bf16[128,128]{1,0:T(16,128)(2,1)}', space=vmem, size = 0x8000, scoped, tag = 'scratch operand']
  %s0 = inlined_call_operand.vmem [shape: bf16[128,128], index: 0, kind: input, shape index: {}]
  %s1 = inlined_call_operand.vmem [shape: bf16[128,128], index: 1, kind: input, shape index: {}]
  %s2 = inlined_call_operand.vmem [shape: f32[1,128], index: 2, kind: input, shape index: {}]
  %s3 = inlined_call_operand.vmem [shape: f32[128,128], index: 3, kind: input, shape index: {}]
  %s4 = inlined_call_operand.vmem [shape: f32[1,128], index: 4, kind: input, shape index: {}]
  %s5 = inlined_call_operand.vmem [shape: f32[128,128], index: 5, kind: input, shape index: {}]
  %s6 = inlined_call_operand.vmem [shape: f32[1,128], index: 6, kind: input, shape index: {}]
  %s7 = inlined_call_operand.vmem [shape: f32[128,128], index: 7, kind: input, shape index: {}]
  %s8 = inlined_call_operand.vmem [shape: f32[1,128], index: 8, kind: input, shape index: {}]
  %s9 = inlined_call_operand.vmem [shape: f32[128,128], index: 9, kind: output, shape index: {}]
  %s10 = sld [smem:[#allocation0]]
  $region77: #{gin_forward.1} parent=0
    _
  %s12 = ssub.s32 1, %s10
  %s13 = scalar_select 0, %s12, %s10
  loop: start=0, step=1, limit=18
  $region2: #{gin_forward.1} parent=0 // loop_pre_header
    _
  $region3: #{gin_forward.1} parent=0 // loop_header
    %s15 = sphi 0, %s19
    %p16 = scmp.ge.s32.totalorder %s15, 18
    %s22 = sphi 0, %s34
    %s23 = sphi 0, %s30
    %s24 = sphi 0, %s22
    %s25 = sphi 0, %s23
    %s26 = sphi 0, %s24
    %s27 = sphi 0, %s25
    %s35 = sphi 0, %s35
    %s37 = sphi 0, %s35
    %s38 = sphi 0, %s37
    %s52 = sphi 0, %s38
    %s56 = sphi 0, %s56
    %s58 = sphi 0, %s56
    %s59 = sphi 0, %s58
    %s73 = sphi 0, %s59
    %s77 = sphi 0, %s77
    %s79 = sphi 0, %s77
    %s80 = sphi 0, %s79
    %s94 = sphi 0, %s80
    %s98 = sphi 0, %s98
    %s100 = sphi 0, %s98
    %s101 = sphi 0, %s100
    %s115 = sphi 0, %s101
    %s119 = sphi 0, %s119
    %s121 = sphi 0, %s119
    %s122 = sphi 0, %s121
    %s136 = sphi 0, %s122
    %s140 = sphi 0, %s140
    %s142 = sphi 0, %s140
    %s143 = sphi 0, %s142
    %s157 = sphi 0, %s143
    %s161 = sphi 0, %s161
    %s163 = sphi 0, %s161
    %s164 = sphi 0, %s163
    %s178 = sphi 0, %s164
    %s182 = sphi 0, %s182
    %s184 = sphi 0, %s182
    %s185 = sphi 0, %s184
    %s199 = sphi 0, %s185
    %s203 = sphi 0, %s203
    %s205 = sphi 0, %s203
    %s206 = sphi 0, %s205
    %s220 = sphi 0, %s206
    %s226 = sphi 0, %s228
    %s229 = sphi 0, %s226
    %s230 = sphi 0, %s229
    %s246 = sphi 0, %s230
  $region4: #{gin_forward.1} parent=0 // loop_header_branch
    %18 = sbr.rel (%p16) target = $region8
  $region5: #{gin_forward.1} parent=0 // loop_body
    %s20 = ssub.s32 %s15, 1
    %s21 = ssub.s32 %s15, 2
    %s28 = sadd.s32 1, %s23
    %p29 = scmp.ge.s32.totalorder %s28, 8
    %s30 = scalar_select %p29, 0, %s28
    %s31 = sadd.s32 1, %s22
    %s32 = scalar_select %p29, %s31, %s22
    %p33 = scmp.ge.s32.totalorder %s32, 2
    %s34 = scalar_select %p33, 0, %s32
    %s36 = sadd.s32 %s35, 1
    %p39 = scmp.eq.s32.totalorder %s15, 15
    %p40 = scmp.ne.s32.totalorder %s35, %s37
    %p41 = scmp.eq.s32.totalorder %s15, 0
    %p42 = por %p40, %p41
    %p43 = scmp.ne.s32.totalorder %s35, %s37
    %p44 = scmp.eq.s32.totalorder %s20, 15
    %p45 = por %p43, %p44
    %p46 = scmp.ne.s32.totalorder %s37, %s38
    %p47 = scmp.eq.s32.totalorder %s20, 0
    %p48 = por %p46, %p47
    %p49 = scmp.ne.s32.totalorder %s37, %s38
    %p50 = scmp.eq.s32.totalorder %s21, 15
    %p51 = por %p49, %p50
    %p53 = scmp.ne.s32.totalorder %s38, %s52
    %p54 = scmp.eq.s32.totalorder %s21, 0
    %p55 = por %p53, %p54
    %s57 = sadd.s32 %s56, 1
    %p60 = scmp.eq.s32.totalorder %s15, 15
    %p61 = scmp.ne.s32.totalorder %s56, %s58
    %p62 = scmp.eq.s32.totalorder %s15, 0
    %p63 = por %p61, %p62
    %p64 = scmp.ne.s32.totalorder %s56, %s58
    %p65 = scmp.eq.s32.totalorder %s20, 15
    %p66 = por %p64, %p65
    %p67 = scmp.ne.s32.totalorder %s58, %s59
    %p68 = scmp.eq.s32.totalorder %s20, 0
    %p69 = por %p67, %p68
    %p70 = scmp.ne.s32.totalorder %s58, %s59
    %p71 = scmp.eq.s32.totalorder %s21, 15
    %p72 = por %p70, %p71
    %p74 = scmp.ne.s32.totalorder %s59, %s73
    %p75 = scmp.eq.s32.totalorder %s21, 0
    %p76 = por %p74, %p75
    %s78 = sadd.s32 %s77, 1
    %p81 = scmp.eq.s32.totalorder %s15, 15
    %p82 = scmp.ne.s32.totalorder %s77, %s79
    %p83 = scmp.eq.s32.totalorder %s15, 0
    %p84 = por %p82, %p83
    %p85 = scmp.ne.s32.totalorder %s77, %s79
    %p86 = scmp.eq.s32.totalorder %s20, 15
    %p87 = por %p85, %p86
    %p88 = scmp.ne.s32.totalorder %s79, %s80
    %p89 = scmp.eq.s32.totalorder %s20, 0
    %p90 = por %p88, %p89
    %p91 = scmp.ne.s32.totalorder %s79, %s80
    %p92 = scmp.eq.s32.totalorder %s21, 15
    %p93 = por %p91, %p92
    %p95 = scmp.ne.s32.totalorder %s80, %s94
    %p96 = scmp.eq.s32.totalorder %s21, 0
    %p97 = por %p95, %p96
    %s99 = sadd.s32 %s98, 1
    %p102 = scmp.eq.s32.totalorder %s15, 15
    %p103 = scmp.ne.s32.totalorder %s98, %s100
    %p104 = scmp.eq.s32.totalorder %s15, 0
    %p105 = por %p103, %p104
    %p106 = scmp.ne.s32.totalorder %s98, %s100
    %p107 = scmp.eq.s32.totalorder %s20, 15
    %p108 = por %p106, %p107
    %p109 = scmp.ne.s32.totalorder %s100, %s101
    %p110 = scmp.eq.s32.totalorder %s20, 0
    %p111 = por %p109, %p110
    %p112 = scmp.ne.s32.totalorder %s100, %s101
    %p113 = scmp.eq.s32.totalorder %s21, 15
    %p114 = por %p112, %p113
    %p116 = scmp.ne.s32.totalorder %s101, %s115
    %p117 = scmp.eq.s32.totalorder %s21, 0
    %p118 = por %p116, %p117
    %s120 = sadd.s32 %s119, 1
    %p123 = scmp.eq.s32.totalorder %s15, 15
    %p124 = scmp.ne.s32.totalorder %s119, %s121
    %p125 = scmp.eq.s32.totalorder %s15, 0
    %p126 = por %p124, %p125
    %p127 = scmp.ne.s32.totalorder %s119, %s121
    %p128 = scmp.eq.s32.totalorder %s20, 15
    %p129 = por %p127, %p128
    %p130 = scmp.ne.s32.totalorder %s121, %s122
    %p131 = scmp.eq.s32.totalorder %s20, 0
    %p132 = por %p130, %p131
    %p133 = scmp.ne.s32.totalorder %s121, %s122
    %p134 = scmp.eq.s32.totalorder %s21, 15
    %p135 = por %p133, %p134
    %p137 = scmp.ne.s32.totalorder %s122, %s136
    %p138 = scmp.eq.s32.totalorder %s21, 0
    %p139 = por %p137, %p138
    %s141 = sadd.s32 %s140, 1
    %p144 = scmp.eq.s32.totalorder %s15, 15
    %p145 = scmp.ne.s32.totalorder %s140, %s142
    %p146 = scmp.eq.s32.totalorder %s15, 0
    %p147 = por %p145, %p146
    %p148 = scmp.ne.s32.totalorder %s140, %s142
    %p149 = scmp.eq.s32.totalorder %s20, 15
    %p150 = por %p148, %p149
    %p151 = scmp.ne.s32.totalorder %s142, %s143
    %p152 = scmp.eq.s32.totalorder %s20, 0
    %p153 = por %p151, %p152
    %p154 = scmp.ne.s32.totalorder %s142, %s143
    %p155 = scmp.eq.s32.totalorder %s21, 15
    %p156 = por %p154, %p155
    %p158 = scmp.ne.s32.totalorder %s143, %s157
    %p159 = scmp.eq.s32.totalorder %s21, 0
    %p160 = por %p158, %p159
    %s162 = sadd.s32 %s161, 1
    %p165 = scmp.eq.s32.totalorder %s15, 15
    %p166 = scmp.ne.s32.totalorder %s161, %s163
    %p167 = scmp.eq.s32.totalorder %s15, 0
    %p168 = por %p166, %p167
    %p169 = scmp.ne.s32.totalorder %s161, %s163
    %p170 = scmp.eq.s32.totalorder %s20, 15
    %p171 = por %p169, %p170
    %p172 = scmp.ne.s32.totalorder %s163, %s164
    %p173 = scmp.eq.s32.totalorder %s20, 0
    %p174 = por %p172, %p173
    %p175 = scmp.ne.s32.totalorder %s163, %s164
    %p176 = scmp.eq.s32.totalorder %s21, 15
    %p177 = por %p175, %p176
    %p179 = scmp.ne.s32.totalorder %s164, %s178
    %p180 = scmp.eq.s32.totalorder %s21, 0
    %p181 = por %p179, %p180
    %s183 = sadd.s32 %s182, 1
    %p186 = scmp.eq.s32.totalorder %s15, 15
    %p187 = scmp.ne.s32.totalorder %s182, %s184
    %p188 = scmp.eq.s32.totalorder %s15, 0
    %p189 = por %p187, %p188
    %p190 = scmp.ne.s32.totalorder %s182, %s184
    %p191 = scmp.eq.s32.totalorder %s20, 15
    %p192 = por %p190, %p191
    %p193 = scmp.ne.s32.totalorder %s184, %s185
    %p194 = scmp.eq.s32.totalorder %s20, 0
    %p195 = por %p193, %p194
    %p196 = scmp.ne.s32.totalorder %s184, %s185
    %p197 = scmp.eq.s32.totalorder %s21, 15
    %p198 = por %p196, %p197
    %p200 = scmp.ne.s32.totalorder %s185, %s199
    %p201 = scmp.eq.s32.totalorder %s21, 0
    %p202 = por %p200, %p201
    %s204 = sadd.s32 %s203, 1
    %p207 = scmp.eq.s32.totalorder %s15, 15
    %p208 = scmp.ne.s32.totalorder %s203, %s205
    %p209 = scmp.eq.s32.totalorder %s15, 0
    %p210 = por %p208, %p209
    %p211 = scmp.ne.s32.totalorder %s203, %s205
    %p212 = scmp.eq.s32.totalorder %s20, 15
    %p213 = por %p211, %p212
    %p214 = scmp.ne.s32.totalorder %s205, %s206
    %p215 = scmp.eq.s32.totalorder %s20, 0
    %p216 = por %p214, %p215
    %p217 = scmp.ne.s32.totalorder %s205, %s206
    %p218 = scmp.eq.s32.totalorder %s21, 15
    %p219 = por %p217, %p218
    %p221 = scmp.ne.s32.totalorder %s206, %s220
    %p222 = scmp.eq.s32.totalorder %s21, 0
    %p223 = por %p221, %p222
    %s224 = ssub.s32 %s23, %s30
    %p225 = scmp.eq.s32.totalorder %s224, 0
    %s227 = sadd.s32 %s226, 1
    %s228 = scalar_select %p225, %s226, %s227
    %p231 = pneg %p225
    %p232 = scmp.eq.s32.totalorder %s15, 15
    %p233 = por %p231, %p232
    %p234 = scmp.ne.s32.totalorder %s226, %s229
    %p235 = scmp.eq.s32.totalorder %s15, 0
    %p236 = por %p234, %p235
    %p237 = scmp.ne.s32.totalorder %s226, %s229
    %p238 = scmp.eq.s32.totalorder %s20, 15
    %p239 = por %p237, %p238
    %p240 = scmp.ne.s32.totalorder %s229, %s230
    %p241 = scmp.eq.s32.totalorder %s20, 0
    %p242 = por %p240, %p241
    %p243 = scmp.ne.s32.totalorder %s229, %s230
    %p244 = scmp.eq.s32.totalorder %s21, 15
    %p245 = por %p243, %p244
    %p247 = scmp.ne.s32.totalorder %s230, %s246
    %p248 = scmp.eq.s32.totalorder %s21, 0
    %p249 = por %p247, %p248
    %p250 = scmp.le.s32.totalorder 1, %s15
    %p251 = scmp.lt.s32.totalorder %s15, 17
    %p252 = pnand %p250, %p251
    %p253 = pneg %p252
    // Predicated region
    $region9: #{gin_forward.1} parent=5 // pred_check
      _
    $region10: #{gin_forward.1} parent=5 // pred_check_branch
      %255 = sbr.rel (%p252) target = $region12
    $region11: #{gin_forward.1} parent=5 // pred_region
      %s256 = ssub.s32 %s15, 1
      // Predicated region
      $region13: #{gin_forward.1} parent=11 // pred_check
        %p257 = pneg %p48
      $region14: #{gin_forward.1} parent=11 // pred_check_branch
        %259 = sbr.rel (%p257) target = $region16
      $region15: #{gin_forward.1} parent=11 // pred_region
        _
      $region16: #{gin_forward.1} parent=11 // pred_fallthru
        _
      // Predicated region
      $region17: #{gin_forward.1} parent=11 // pred_check
        %p260 = pneg %p69
      $region18: #{gin_forward.1} parent=11 // pred_check_branch
        %262 = sbr.rel (%p260) target = $region20
      $region19: #{gin_forward.1} parent=11 // pred_region
        _
      $region20: #{gin_forward.1} parent=11 // pred_fallthru
        _
      // Predicated region
      $region21: #{gin_forward.1} parent=11 // pred_check
        %p263 = pneg %p90
      $region22: #{gin_forward.1} parent=11 // pred_check_branch
        %265 = sbr.rel (%p263) target = $region24
      $region23: #{gin_forward.1} parent=11 // pred_region
        _
      $region24: #{gin_forward.1} parent=11 // pred_fallthru
        _
      // Predicated region
      $region25: #{gin_forward.1} parent=11 // pred_check
        %p266 = pneg %p111
      $region26: #{gin_forward.1} parent=11 // pred_check_branch
        %268 = sbr.rel (%p266) target = $region28
      $region27: #{gin_forward.1} parent=11 // pred_region
        _
      $region28: #{gin_forward.1} parent=11 // pred_fallthru
        _
      // Predicated region
      $region29: #{gin_forward.1} parent=11 // pred_check
        %p269 = pneg %p132
      $region30: #{gin_forward.1} parent=11 // pred_check_branch
        %271 = sbr.rel (%p269) target = $region32
      $region31: #{gin_forward.1} parent=11 // pred_region
        _
      $region32: #{gin_forward.1} parent=11 // pred_fallthru
        _
      // Predicated region
      $region33: #{gin_forward.1} parent=11 // pred_check
        %p272 = pneg %p153
      $region34: #{gin_forward.1} parent=11 // pred_check_branch
        %274 = sbr.rel (%p272) target = $region36
      $region35: #{gin_forward.1} parent=11 // pred_region
        _
      $region36: #{gin_forward.1} parent=11 // pred_fallthru
        _
      // Predicated region
      $region37: #{gin_forward.1} parent=11 // pred_check
        %p275 = pneg %p174
      $region38: #{gin_forward.1} parent=11 // pred_check_branch
        %277 = sbr.rel (%p275) target = $region40
      $region39: #{gin_forward.1} parent=11 // pred_region
        _
      $region40: #{gin_forward.1} parent=11 // pred_fallthru
        _
      // Predicated region
      $region41: #{gin_forward.1} parent=11 // pred_check
        %p278 = pneg %p195
      $region42: #{gin_forward.1} parent=11 // pred_check_branch
        %280 = sbr.rel (%p278) target = $region44
      $region43: #{gin_forward.1} parent=11 // pred_region
        _
      $region44: #{gin_forward.1} parent=11 // pred_fallthru
        _
      // Predicated region
      $region45: #{gin_forward.1} parent=11 // pred_check
        %p281 = pneg %p216
      $region46: #{gin_forward.1} parent=11 // pred_check_branch
        %283 = sbr.rel (%p281) target = $region48
      $region47: #{gin_forward.1} parent=11 // pred_region
        _
      $region48: #{gin_forward.1} parent=11 // pred_fallthru
        _
    $region12: #{gin_forward.1} parent=5 // pred_fallthru
      _
    %p284 = scmp.lt.s32.totalorder %s15, 16
    // Predicated region
    $region49: #{gin_forward.1} parent=5 // pred_check
      %p285 = pneg %p284
    $region50: #{gin_forward.1} parent=5 // pred_check_branch
      %287 = sbr.rel (%p285) target = $region52
    $region51: #{gin_forward.1} parent=5 // pred_region
      _
    $region52: #{gin_forward.1} parent=5 // pred_fallthru
      _
    %p288 = scmp.le.s32.totalorder 1, %s15
    %p289 = scmp.lt.s32.totalorder %s15, 17
    %p290 = pnand %p288, %p289
    %p291 = pneg %p290
    // Predicated region
    $region53: #{gin_forward.1} parent=5 // pred_check
      _
    $region54: #{gin_forward.1} parent=5 // pred_check_branch
      %293 = sbr.rel (%p290) target = $region56
    $region55: #{gin_forward.1} parent=5 // pred_region
      %s294 = ssub.s32 %s15, 1
      %p295 = pneg %p48
      %p296 = pneg %p45
      %p297 = pneg %p69
      %p298 = pneg %p66
      %p299 = pneg %p90
      %p300 = pneg %p87
      %p301 = pneg %p111
      %p302 = pneg %p108
      %p303 = pneg %p132
      %p304 = pneg %p129
      %p305 = pneg %p153
      %p306 = pneg %p150
      %p307 = pneg %p174
      %p308 = pneg %p171
      %p309 = pneg %p195
      %p310 = pneg %p192
      %p311 = pneg %p216
      %p312 = pneg %p213
      %p313 = pneg %p242
      %p314 = pneg %p239
      %s315 = smul.u32 2, %s25
      %p316 = scmp.lt.s32.totalorder %s315, 15
      %s317 = scalar_select %p316, %s315, 15
      %s318 = smul.addr %s317, 8
      %s319 = scalar_lea.vmem %s9, %s318
      %s320 = smul.u32 2, %s25
      %p321 = scmp.lt.s32.totalorder %s320, 15
      %s322 = scalar_select %p321, %s320, 15
      %s323 = smul.addr %s322, 8
      %s324 = scalar_lea.vmem %s9, %s323
      %s325 = smul.u32 2, %s25
      %s327 = smul.u32 %s25, 16
      %s328 = sshra.s32 %s327, 3
      %s329 = sand.u32 %s327, 7
      %s330 = smul.addr %s328, 4
      %s331 = scalar_lea.vmem %s0, %s330
      %v332 = vld [vmem:[%s331] sm:$0xf]
      %v333 = vld [vmem:[%s331 + $0x4] sm:$0xf]
      %p334 = scmp.eq.s32.totalorder %s24, 0
      // Predicated region
      $region57: #{gin_forward.1} parent=55 // pred_check
        %p335 = pneg %p334
      $region58: #{gin_forward.1} parent=55 // pred_check_branch
        %337 = sbr.rel (%p335) target = $region60
      $region59: #{gin_forward.1} parent=55 // pred_region
        %v338 = vld [vmem:[%s1] sm:$0xf]
        %v339 = vld [vmem:[%s1 + $0x4] sm:$0xf]
        %v340 = vld [vmem:[%s1 + $0x8] sm:$0xf]
        %v341 = vld [vmem:[%s1 + $0xc] sm:$0xf]
        %v342 = vld [vmem:[%s1 + $0x10] sm:$0xf]
        %v343 = vld [vmem:[%s1 + $0x14] sm:$0xf]
        %v344 = vld [vmem:[%s1 + $0x18] sm:$0xf]
        %v345 = vld [vmem:[%s1 + $0x1c] sm:$0xf]
        %v346 = vld [vmem:[%s1 + $0x20] sm:$0xf]
        %v347 = vld [vmem:[%s1 + $0x24] sm:$0xf]
        %v348 = vld [vmem:[%s1 + $0x28] sm:$0xf]
        %v349 = vld [vmem:[%s1 + $0x2c] sm:$0xf]
        %v350 = vld [vmem:[%s1 + $0x30] sm:$0xf]
        %v351 = vld [vmem:[%s1 + $0x34] sm:$0xf]
        %v352 = vld [vmem:[%s1 + $0x38] sm:$0xf]
        %v353 = vld [vmem:[%s1 + $0x3c] sm:$0xf]
        %v356 = vunpack.c.l.b16 %v332
        %v357 = vunpack.c.l.b16 %v333
        %v358 = vpack.c.b16 %v357, %v356
        %v376 = vunpack.c.l.b16 %v338
        %v377 = vunpack.c.l.b16 %v339
        %v378 = vunpack.c.l.b16 %v340
        %v379 = vunpack.c.l.b16 %v341
        %v380 = vunpack.c.l.b16 %v342
        %v381 = vunpack.c.l.b16 %v343
        %v382 = vunpack.c.l.b16 %v344
        %v383 = vunpack.c.l.b16 %v345
        %v384 = vunpack.c.l.b16 %v346
        %v385 = vunpack.c.l.b16 %v347
        %v386 = vunpack.c.l.b16 %v348
        %v387 = vunpack.c.l.b16 %v349
        %v388 = vunpack.c.l.b16 %v350
        %v389 = vunpack.c.l.b16 %v351
        %v390 = vunpack.c.l.b16 %v352
        %v391 = vunpack.c.l.b16 %v353
        %v392 = vpack.c.b16 %v377, %v376
        %v393 = vpack.c.b16 %v379, %v378
        %v394 = vpack.c.b16 %v381, %v380
        %v395 = vpack.c.b16 %v383, %v382
        %v396 = vpack.c.b16 %v385, %v384
        %v397 = vpack.c.b16 %v387, %v386
        %v398 = vpack.c.b16 %v389, %v388
        %v399 = vpack.c.b16 %v391, %v390
        %408 = vmatprep.subr.bf16.mxu0 0
        %409 = vmatpush1.bf16.msra.mxu0 %v392
        %410 = vmatprep.subr.bf16.mxu0 0
        %411 = vmatpush1.bf16.msra.mxu0 %v393
        %412 = vmatprep.subr.bf16.mxu0 0
        %413 = vmatpush1.bf16.msra.mxu0 %v394
        %414 = vmatprep.subr.bf16.mxu0 0
        %415 = vmatpush1.bf16.msra.mxu0 %v395
        %416 = vmatprep.subr.bf16.mxu0 0
        %417 = vmatpush1.bf16.msra.mxu0 %v396
        %418 = vmatprep.subr.bf16.mxu0 0
        %419 = vmatpush1.bf16.msra.mxu0 %v397
        %420 = vmatprep.subr.bf16.mxu0 0
        %421 = vmatpush1.bf16.msra.mxu0 %v398
        %422 = vmatprep.subr.bf16.mxu0 0
        %423 = vmatpush1.bf16.msra.mxu0 %v399
        %424 = vmatprep.subr.bf16.mxu0 0
        %425 = vmatpush1.bf16.msra.mxu0 0
        %426 = vmatprep.subr.bf16.mxu0 0
        %427 = vmatpush1.bf16.msra.mxu0 0
        %428 = vmatprep.subr.bf16.mxu0 0
        %429 = vmatpush1.bf16.msra.mxu0 0
        %430 = vmatprep.subr.bf16.mxu0 0
        %431 = vmatpush1.bf16.msra.mxu0 0
        %432 = vmatprep.subr.bf16.mxu0 0
        %433 = vmatpush1.bf16.msra.mxu0 0
        %434 = vmatprep.subr.bf16.mxu0 0
        %435 = vmatpush1.bf16.msra.mxu0 0
        %436 = vmatprep.subr.bf16.mxu0 0
        %437 = vmatpush1.bf16.msra.mxu0 0
        %438 = vmatprep.subr.bf16.mxu0 0
        %439 = vmatpush1.bf16.msra.mxu0 0
        %440 = vmatprep.mubr.bf16.mxu0 0
        %441 = vmatmul.mubr.bf16.gmra.mrb[0].mxu0 %v358
        %v442 = vpop.f32.mrb[0].mxu0
        %v443 = vadd.f32 0.0, %v442
        %v444 = vpop.f32.mrb[0].mxu0
        %v445 = vpop.f32.mrb[0].mxu0
        %v446 = vadd.f32 0.0, %v445
        %v447 = vpop.f32.mrb[0].mxu0
        %448 = vdwg.mxu0
        %s449 = smul.addr %s328, 4
        %s450 = scalar_lea.vmem %s1, %s449
        %v451 = vld [vmem:[%s450] sm:$0xf]
        %v452 = vld [vmem:[%s450 + $0x4] sm:$0xf]
        %v453 = vunpack.c.l.bf16 %v451
        %v454 = vunpack.c.l.bf16 %v452
        %v455 = vadd.f32 %v453, %v443
        %v456 = vadd.f32 %v454, %v446
        %v457 = vld [vmem:[%s2] sm:$0x1]
        %v459 = vlaneseq
        %v460 = vshrl.u32 %v459, 7
        %v461 = vsub.s32 0, %v460
        %v462 = vrot.slane %v457, %v461
        %v464 = vadd.f32 %v455, %v462
        %v465 = vadd.f32 %v456, %v462
        %v466 = vmax.f32 %v464, 0.0
        %v467 = vmax.f32 %v465, 0.0
        %v468 = vld [vmem:[%s3] sm:$0xff]
        %v469 = vld [vmem:[%s3 + $0x8] sm:$0xff]
        %v470 = vld [vmem:[%s3 + $0x10] sm:$0xff]
        %v471 = vld [vmem:[%s3 + $0x18] sm:$0xff]
        %v472 = vld [vmem:[%s3 + $0x20] sm:$0xff]
        %v473 = vld [vmem:[%s3 + $0x28] sm:$0xff]
        %v474 = vld [vmem:[%s3 + $0x30] sm:$0xff]
        %v475 = vld [vmem:[%s3 + $0x38] sm:$0xff]
        %v476 = vld [vmem:[%s3 + $0x40] sm:$0xff]
        %v477 = vld [vmem:[%s3 + $0x48] sm:$0xff]
        %v478 = vld [vmem:[%s3 + $0x50] sm:$0xff]
        %v479 = vld [vmem:[%s3 + $0x58] sm:$0xff]
        %v480 = vld [vmem:[%s3 + $0x60] sm:$0xff]
        %v481 = vld [vmem:[%s3 + $0x68] sm:$0xff]
        %v482 = vld [vmem:[%s3 + $0x70] sm:$0xff]
        %v483 = vld [vmem:[%s3 + $0x78] sm:$0xff]
        %v484 = vld [vmem:[%s4] sm:$0x1]
        %v486 = vlaneseq
        %v487 = vshrl.u32 %v486, 7
        %v488 = vsub.s32 0, %v487
        %v489 = vrot.slane %v484, %v488
        %491 = vmatprep.subr.mxu0 0.0
        %492 = vmatpush1.msra.mxu0 %v468
        %493 = vmatprep.subr.mxu0 0.0
        %494 = vmatpush1.msra.mxu0 %v469
        %495 = vmatprep.subr.mxu0 0.0
        %496 = vmatpush1.msra.mxu0 %v470
        %497 = vmatprep.subr.mxu0 0.0
        %498 = vmatpush1.msra.mxu0 %v471
        %499 = vmatprep.subr.mxu0 0.0
        %500 = vmatpush1.msra.mxu0 %v472
        %501 = vmatprep.subr.mxu0 0.0
        %502 = vmatpush1.msra.mxu0 %v473
        %503 = vmatprep.subr.mxu0 0.0
        %504 = vmatpush1.msra.mxu0 %v474
        %505 = vmatprep.subr.mxu0 0.0
        %506 = vmatpush1.msra.mxu0 %v475
        %507 = vmatprep.subr.mxu0 0.0
        %508 = vmatpush1.msra.mxu0 %v476
        %509 = vmatprep.subr.mxu0 0.0
        %510 = vmatpush1.msra.mxu0 %v477
        %511 = vmatprep.subr.mxu0 0.0
        %512 = vmatpush1.msra.mxu0 %v478
        %513 = vmatprep.subr.mxu0 0.0
        %514 = vmatpush1.msra.mxu0 %v479
        %515 = vmatprep.subr.mxu0 0.0
        %516 = vmatpush1.msra.mxu0 %v480
        %517 = vmatprep.subr.mxu0 0.0
        %518 = vmatpush1.msra.mxu0 %v481
        %519 = vmatprep.subr.mxu0 0.0
        %520 = vmatpush1.msra.mxu0 %v482
        %521 = vmatprep.subr.mxu0 0.0
        %522 = vmatpush1.msra.mxu0 %v483
        %523 = vmatprep.subr.mxu0 0.0
        %524 = vmatpush1.msra.mxu0 0.0
        %525 = vmatprep.subr.mxu0 0.0
        %526 = vmatpush1.msra.mxu0 0.0
        %527 = vmatprep.subr.mxu0 0.0
        %528 = vmatpush1.msra.mxu0 0.0
        %529 = vmatprep.subr.mxu0 0.0
        %530 = vmatpush1.msra.mxu0 0.0
        %531 = vmatprep.subr.mxu0 0.0
        %532 = vmatpush1.msra.mxu0 0.0
        %533 = vmatprep.subr.mxu0 0.0
        %534 = vmatpush1.msra.mxu0 0.0
        %535 = vmatprep.subr.mxu0 0.0
        %536 = vmatpush1.msra.mxu0 0.0
        %537 = vmatprep.subr.mxu0 0.0
        %538 = vmatpush1.msra.mxu0 0.0
        %539 = vmatprep.subr.mxu0 0.0
        %540 = vmatpush1.msra.mxu0 0.0
        %541 = vmatprep.subr.mxu0 0.0
        %542 = vmatpush1.msra.mxu0 0.0
        %543 = vmatprep.subr.mxu0 0.0
        %544 = vmatpush1.msra.mxu0 0.0
        %545 = vmatprep.subr.mxu0 0.0
        %546 = vmatpush1.msra.mxu0 0.0
        %547 = vmatprep.subr.mxu0 0.0
        %548 = vmatpush1.msra.mxu0 0.0
        %549 = vmatprep.subr.mxu0 0.0
        %550 = vmatpush1.msra.mxu0 0.0
        %551 = vmatprep.subr.mxu0 0.0
        %552 = vmatpush1.msra.mxu0 0.0
        %553 = vmatprep.subr.mxu0 0.0
        %554 = vmatpush1.msra.mxu0 0.0
        %555 = vmatprep.mubr.f32.mxu0 0.0
        %556 = vmatmul.mubr.f32.gmra.mrb[0].mxu0 %v466
        %v557 = vpop.f32.mrb[0].mxu0
        %v558 = vadd.f32 %v489, %v557
        %v559 = vpop.f32.mrb[0].mxu0
        %560 = vmatprep.mubr.f32.mxu0 0.0
        %561 = vmatmul.mubr.f32.gmra.mrb[0].mxu0 %v467
        %v562 = vpop.f32.mrb[0].mxu0
        %v563 = vadd.f32 %v489, %v562
        %v564 = vpop.f32.mrb[0].mxu0
        %565 = vdwg.mxu0
        %v566 = vmax.f32 %v558, 0.0
        %v567 = vmax.f32 %v563, 0.0
        %v568 = vld [vmem:[%s5] sm:$0xff]
        %v569 = vld [vmem:[%s5 + $0x8] sm:$0xff]
        %v570 = vld [vmem:[%s5 + $0x10] sm:$0xff]
        %v571 = vld [vmem:[%s5 + $0x18] sm:$0xff]
        %v572 = vld [vmem:[%s5 + $0x20] sm:$0xff]
        %v573 = vld [vmem:[%s5 + $0x28] sm:$0xff]
        %v574 = vld [vmem:[%s5 + $0x30] sm:$0xff]
        %v575 = vld [vmem:[%s5 + $0x38] sm:$0xff]
        %v576 = vld [vmem:[%s5 + $0x40] sm:$0xff]
        %v577 = vld [vmem:[%s5 + $0x48] sm:$0xff]
        %v578 = vld [vmem:[%s5 + $0x50] sm:$0xff]
        %v579 = vld [vmem:[%s5 + $0x58] sm:$0xff]
        %v580 = vld [vmem:[%s5 + $0x60] sm:$0xff]
        %v581 = vld [vmem:[%s5 + $0x68] sm:$0xff]
        %v582 = vld [vmem:[%s5 + $0x70] sm:$0xff]
        %v583 = vld [vmem:[%s5 + $0x78] sm:$0xff]
        %584 = vmatprep.subr.mxu0 0.0
        %585 = vmatpush1.msra.mxu0 %v568
        %586 = vmatprep.subr.mxu0 0.0
        %587 = vmatpush1.msra.mxu0 %v569
        %588 = vmatprep.subr.mxu0 0.0
        %589 = vmatpush1.msra.mxu0 %v570
        %590 = vmatprep.subr.mxu0 0.0
        %591 = vmatpush1.msra.mxu0 %v571
        %592 = vmatprep.subr.mxu0 0.0
        %593 = vmatpush1.msra.mxu0 %v572
        %594 = vmatprep.subr.mxu0 0.0
        %595 = vmatpush1.msra.mxu0 %v573
        %596 = vmatprep.subr.mxu0 0.0
        %597 = vmatpush1.msra.mxu0 %v574
        %598 = vmatprep.subr.mxu0 0.0
        %599 = vmatpush1.msra.mxu0 %v575
        %600 = vmatprep.subr.mxu0 0.0
        %601 = vmatpush1.msra.mxu0 %v576
        %602 = vmatprep.subr.mxu0 0.0
        %603 = vmatpush1.msra.mxu0 %v577
        %604 = vmatprep.subr.mxu0 0.0
        %605 = vmatpush1.msra.mxu0 %v578
        %606 = vmatprep.subr.mxu0 0.0
        %607 = vmatpush1.msra.mxu0 %v579
        %608 = vmatprep.subr.mxu0 0.0
        %609 = vmatpush1.msra.mxu0 %v580
        %610 = vmatprep.subr.mxu0 0.0
        %611 = vmatpush1.msra.mxu0 %v581
        %612 = vmatprep.subr.mxu0 0.0
        %613 = vmatpush1.msra.mxu0 %v582
        %614 = vmatprep.subr.mxu0 0.0
        %615 = vmatpush1.msra.mxu0 %v583
        %616 = vmatprep.subr.mxu0 0.0
        %617 = vmatpush1.msra.mxu0 0.0
        %618 = vmatprep.subr.mxu0 0.0
        %619 = vmatpush1.msra.mxu0 0.0
        %620 = vmatprep.subr.mxu0 0.0
        %621 = vmatpush1.msra.mxu0 0.0
        %622 = vmatprep.subr.mxu0 0.0
        %623 = vmatpush1.msra.mxu0 0.0
        %624 = vmatprep.subr.mxu0 0.0
        %625 = vmatpush1.msra.mxu0 0.0
        %626 = vmatprep.subr.mxu0 0.0
        %627 = vmatpush1.msra.mxu0 0.0
        %628 = vmatprep.subr.mxu0 0.0
        %629 = vmatpush1.msra.mxu0 0.0
        %630 = vmatprep.subr.mxu0 0.0
        %631 = vmatpush1.msra.mxu0 0.0
        %632 = vmatprep.subr.mxu0 0.0
        %633 = vmatpush1.msra.mxu0 0.0
        %634 = vmatprep.subr.mxu0 0.0
        %635 = vmatpush1.msra.mxu0 0.0
        %636 = vmatprep.subr.mxu0 0.0
        %637 = vmatpush1.msra.mxu0 0.0
        %638 = vmatprep.subr.mxu0 0.0
        %639 = vmatpush1.msra.mxu0 0.0
        %640 = vmatprep.subr.mxu0 0.0
        %641 = vmatpush1.msra.mxu0 0.0
        %642 = vmatprep.subr.mxu0 0.0
        %643 = vmatpush1.msra.mxu0 0.0
        %644 = vmatprep.subr.mxu0 0.0
        %645 = vmatpush1.msra.mxu0 0.0
        %646 = vmatprep.subr.mxu0 0.0
        %647 = vmatpush1.msra.mxu0 0.0
        %648 = vmatprep.mubr.f32.mxu0 0.0
        %649 = vmatmul.mubr.f32.gmra.mrb[0].mxu0 %v566
        %v650 = vpop.f32.mrb[0].mxu0
        %v651 = vadd.f32 0.0, %v650
        %v652 = vpop.f32.mrb[0].mxu0
        %653 = vmatprep.mubr.f32.mxu0 0.0
        %654 = vmatmul.mubr.f32.gmra.mrb[0].mxu0 %v567
        %v655 = vpop.f32.mrb[0].mxu0
        %v656 = vadd.f32 0.0, %v655
        %v657 = vpop.f32.mrb[0].mxu0
        %658 = vdwg.mxu0
        %v659 = vpack.c.bf16 %v656, %v651
        %s660 = sshra.s32 %s327, 4
        %s661 = sand.u32 %s327, 15
        %s662 = smul.addr %s660, 8
        %s663 = scalar_lea.vmem [#allocation2], %s662
        %664 = vst [vmem:[%s663] sm:$0xff] %v659
        %665 = vst [vmem:[%s324] sm:$0xff] 0.0
        %666 = vst [vmem:[%s324 + $0x8] sm:$0xff] 0.0
      $region60: #{gin_forward.1} parent=55 // pred_fallthru
        _
      %p667 = scmp.eq.s32.totalorder %s24, 1
      // Predicated region
      $region61: #{gin_forward.1} parent=55 // pred_check
        %p668 = pneg %p667
      $region62: #{gin_forward.1} parent=55 // pred_check_branch
        %670 = sbr.rel (%p668) target = $region64
      $region63: #{gin_forward.1} parent=55 // pred_region
        %v671 = vld [vmem:[#allocation2] sm:$0xff]
        %v672 = vld [vmem:[#allocation2 + $0x8] sm:$0xff]
        %v673 = vld [vmem:[#allocation2 + $0x10] sm:$0xff]
        %v674 = vld [vmem:[#allocation2 + $0x18] sm:$0xff]
        %v675 = vld [vmem:[#allocation2 + $0x20] sm:$0xff]
        %v676 = vld [vmem:[#allocation2 + $0x28] sm:$0xff]
        %v677 = vld [vmem:[#allocation2 + $0x30] sm:$0xff]
        %v678 = vld [vmem:[#allocation2 + $0x38] sm:$0xff]
        %v681 = vunpack.c.l.b16 %v332
        %v682 = vunpack.c.l.b16 %v333
        %v683 = vpack.c.b16 %v682, %v681
        %685 = vmatprep.subr.bf16.mxu0 0
        %686 = vmatpush1.bf16.msra.mxu0 %v671
        %687 = vmatprep.subr.bf16.mxu0 0
        %688 = vmatpush1.bf16.msra.mxu0 %v672
        %689 = vmatprep.subr.bf16.mxu0 0
        %690 = vmatpush1.bf16.msra.mxu0 %v673
        %691 = vmatprep.subr.bf16.mxu0 0
        %692 = vmatpush1.bf16.msra.mxu0 %v674
        %693 = vmatprep.subr.bf16.mxu0 0
        %694 = vmatpush1.bf16.msra.mxu0 %v675
        %695 = vmatprep.subr.bf16.mxu0 0
        %696 = vmatpush1.bf16.msra.mxu0 %v676
        %697 = vmatprep.subr.bf16.mxu0 0
        %698 = vmatpush1.bf16.msra.mxu0 %v677
        %699 = vmatprep.subr.bf16.mxu0 0
        %700 = vmatpush1.bf16.msra.mxu0 %v678
        %701 = vmatprep.subr.bf16.mxu0 0
        %702 = vmatpush1.bf16.msra.mxu0 0
        %703 = vmatprep.subr.bf16.mxu0 0
        %704 = vmatpush1.bf16.msra.mxu0 0
        %705 = vmatprep.subr.bf16.mxu0 0
        %706 = vmatpush1.bf16.msra.mxu0 0
        %707 = vmatprep.subr.bf16.mxu0 0
        %708 = vmatpush1.bf16.msra.mxu0 0
        %709 = vmatprep.subr.bf16.mxu0 0
        %710 = vmatpush1.bf16.msra.mxu0 0
        %711 = vmatprep.subr.bf16.mxu0 0
        %712 = vmatpush1.bf16.msra.mxu0 0
        %713 = vmatprep.subr.bf16.mxu0 0
        %714 = vmatpush1.bf16.msra.mxu0 0
        %715 = vmatprep.subr.bf16.mxu0 0
        %716 = vmatpush1.bf16.msra.mxu0 0
        %717 = vmatprep.mubr.bf16.mxu0 0
        %718 = vmatmul.mubr.bf16.gmra.mrb[0].mxu0 %v683
        %v719 = vpop.f32.mrb[0].mxu0
        %v720 = vadd.f32 0.0, %v719
        %v721 = vpop.f32.mrb[0].mxu0
        %v722 = vpop.f32.mrb[0].mxu0
        %v723 = vadd.f32 0.0, %v722
        %v724 = vpop.f32.mrb[0].mxu0
        %725 = vdwg.mxu0
        %s726 = sshra.s32 %s327, 4
        %s727 = sand.u32 %s327, 15
        %s728 = smul.addr %s726, 8
        %s729 = scalar_lea.vmem [#allocation2], %s728
        %v730 = vld [vmem:[%s729] sm:$0xff]
        %v731 = vunpack.c.l.bf16 %v730
        %v732 = vunpack.c.h.bf16 %v730
        %v733 = vadd.f32 %v731, %v720
        %v734 = vadd.f32 %v732, %v723
        %v735 = vld [vmem:[%s6] sm:$0x1]
        %v737 = vlaneseq
        %v738 = vshrl.u32 %v737, 7
        %v739 = vsub.s32 0, %v738
        %v740 = vrot.slane %v735, %v739
        %v742 = vadd.f32 %v733, %v740
        %v743 = vadd.f32 %v734, %v740
        %v744 = vmax.f32 %v742, 0.0
        %v745 = vmax.f32 %v743, 0.0
        %v746 = vld [vmem:[%s7] sm:$0xff]
        %v747 = vld [vmem:[%s7 + $0x8] sm:$0xff]
        %v748 = vld [vmem:[%s7 + $0x10] sm:$0xff]
        %v749 = vld [vmem:[%s7 + $0x18] sm:$0xff]
        %v750 = vld [vmem:[%s7 + $0x20] sm:$0xff]
        %v751 = vld [vmem:[%s7 + $0x28] sm:$0xff]
        %v752 = vld [vmem:[%s7 + $0x30] sm:$0xff]
        %v753 = vld [vmem:[%s7 + $0x38] sm:$0xff]
        %v754 = vld [vmem:[%s7 + $0x40] sm:$0xff]
        %v755 = vld [vmem:[%s7 + $0x48] sm:$0xff]
        %v756 = vld [vmem:[%s7 + $0x50] sm:$0xff]
        %v757 = vld [vmem:[%s7 + $0x58] sm:$0xff]
        %v758 = vld [vmem:[%s7 + $0x60] sm:$0xff]
        %v759 = vld [vmem:[%s7 + $0x68] sm:$0xff]
        %v760 = vld [vmem:[%s7 + $0x70] sm:$0xff]
        %v761 = vld [vmem:[%s7 + $0x78] sm:$0xff]
        %v762 = vld [vmem:[%s8] sm:$0x1]
        %v764 = vlaneseq
        %v765 = vshrl.u32 %v764, 7
        %v766 = vsub.s32 0, %v765
        %v767 = vrot.slane %v762, %v766
        %769 = vmatprep.subr.mxu0 0.0
        %770 = vmatpush1.msra.mxu0 %v746
        %771 = vmatprep.subr.mxu0 0.0
        %772 = vmatpush1.msra.mxu0 %v747
        %773 = vmatprep.subr.mxu0 0.0
        %774 = vmatpush1.msra.mxu0 %v748
        %775 = vmatprep.subr.mxu0 0.0
        %776 = vmatpush1.msra.mxu0 %v749
        %777 = vmatprep.subr.mxu0 0.0
        %778 = vmatpush1.msra.mxu0 %v750
        %779 = vmatprep.subr.mxu0 0.0
        %780 = vmatpush1.msra.mxu0 %v751
        %781 = vmatprep.subr.mxu0 0.0
        %782 = vmatpush1.msra.mxu0 %v752
        %783 = vmatprep.subr.mxu0 0.0
        %784 = vmatpush1.msra.mxu0 %v753
        %785 = vmatprep.subr.mxu0 0.0
        %786 = vmatpush1.msra.mxu0 %v754
        %787 = vmatprep.subr.mxu0 0.0
        %788 = vmatpush1.msra.mxu0 %v755
        %789 = vmatprep.subr.mxu0 0.0
        %790 = vmatpush1.msra.mxu0 %v756
        %791 = vmatprep.subr.mxu0 0.0
        %792 = vmatpush1.msra.mxu0 %v757
        %793 = vmatprep.subr.mxu0 0.0
        %794 = vmatpush1.msra.mxu0 %v758
        %795 = vmatprep.subr.mxu0 0.0
        %796 = vmatpush1.msra.mxu0 %v759
        %797 = vmatprep.subr.mxu0 0.0
        %798 = vmatpush1.msra.mxu0 %v760
        %799 = vmatprep.subr.mxu0 0.0
        %800 = vmatpush1.msra.mxu0 %v761
        %801 = vmatprep.subr.mxu0 0.0
        %802 = vmatpush1.msra.mxu0 0.0
        %803 = vmatprep.subr.mxu0 0.0
        %804 = vmatpush1.msra.mxu0 0.0
        %805 = vmatprep.subr.mxu0 0.0
        %806 = vmatpush1.msra.mxu0 0.0
        %807 = vmatprep.subr.mxu0 0.0
        %808 = vmatpush1.msra.mxu0 0.0
        %809 = vmatprep.subr.mxu0 0.0
        %810 = vmatpush1.msra.mxu0 0.0
        %811 = vmatprep.subr.mxu0 0.0
        %812 = vmatpush1.msra.mxu0 0.0
        %813 = vmatprep.subr.mxu0 0.0
        %814 = vmatpush1.msra.mxu0 0.0
        %815 = vmatprep.subr.mxu0 0.0
        %816 = vmatpush1.msra.mxu0 0.0
        %817 = vmatprep.subr.mxu0 0.0
        %818 = vmatpush1.msra.mxu0 0.0
        %819 = vmatprep.subr.mxu0 0.0
        %820 = vmatpush1.msra.mxu0 0.0
        %821 = vmatprep.subr.mxu0 0.0
        %822 = vmatpush1.msra.mxu0 0.0
        %823 = vmatprep.subr.mxu0 0.0
        %824 = vmatpush1.msra.mxu0 0.0
        %825 = vmatprep.subr.mxu0 0.0
        %826 = vmatpush1.msra.mxu0 0.0
        %827 = vmatprep.subr.mxu0 0.0
        %828 = vmatpush1.msra.mxu0 0.0
        %829 = vmatprep.subr.mxu0 0.0
        %830 = vmatpush1.msra.mxu0 0.0
        %831 = vmatprep.subr.mxu0 0.0
        %832 = vmatpush1.msra.mxu0 0.0
        %833 = vmatprep.mubr.f32.mxu0 0.0
        %834 = vmatmul.mubr.f32.gmra.mrb[0].mxu0 %v744
        %v835 = vpop.f32.mrb[0].mxu0
        %v836 = vadd.f32 %v767, %v835
        %v837 = vpop.f32.mrb[0].mxu0
        %838 = vmatprep.mubr.f32.mxu0 0.0
        %839 = vmatmul.mubr.f32.gmra.mrb[0].mxu0 %v745
        %v840 = vpop.f32.mrb[0].mxu0
        %v841 = vadd.f32 %v767, %v840
        %v842 = vpop.f32.mrb[0].mxu0
        %843 = vdwg.mxu0
        %844 = vst [vmem:[%s324] sm:$0xff] %v836
        %845 = vst [vmem:[%s324 + $0x8] sm:$0xff] %v841
      $region64: #{gin_forward.1} parent=55 // pred_fallthru
        _
      %s846 = smul.u32 2, %s25
      %p847 = scmp.lt.s32.totalorder %s846, 15
      %s848 = scalar_select %p847, %s846, 15
      %s849 = smul.addr %s848, 8
      %s850 = scalar_lea.vmem %s9, %s849
      // Predicated region
      $region65: #{gin_forward.1} parent=55 // pred_check
        %p851 = pneg %p239
      $region66: #{gin_forward.1} parent=55 // pred_check_branch
        %853 = sbr.rel (%p851) target = $region68
      $region67: #{gin_forward.1} parent=55 // pred_region
        %s854 = smul.u32 2, %s25
      $region68: #{gin_forward.1} parent=55 // pred_fallthru
        _
    $region56: #{gin_forward.1} parent=5 // pred_fallthru
      _
    %p855 = scmp.le.s32.totalorder 2, %s15
    // Predicated region
    $region69: #{gin_forward.1} parent=5 // pred_check
      %p856 = pneg %p855
    $region70: #{gin_forward.1} parent=5 // pred_check_branch
      %858 = sbr.rel (%p856) target = $region72
    $region71: #{gin_forward.1} parent=5 // pred_region
      %s859 = ssub.s32 %s15, 2
      // Predicated region
      $region73: #{gin_forward.1} parent=71 // pred_check
        %p860 = pneg %p245
      $region74: #{gin_forward.1} parent=71 // pred_check_branch
        %862 = sbr.rel (%p860) target = $region76
      $region75: #{gin_forward.1} parent=71 // pred_region
        %s863 = smul.u32 2, %s27
        %p864 = scmp.lt.s32.totalorder %s863, 15
        %s865 = scalar_select %p864, %s863, 15
        %s866 = smul.addr %s865, 8
        %s867 = scalar_lea.vmem %s9, %s866
      $region76: #{gin_forward.1} parent=71 // pred_fallthru
        _
    $region72: #{gin_forward.1} parent=5 // pred_fallthru
      _
  $region6: #{gin_forward.1} parent=0 // loop_footer
    %s19 = sadd.s32 1, %s15
  $region7: #{gin_forward.1} parent=0 // loop_footer_branch
    %14 = sbr.rel target = $region3
  $region8: #{gin_forward.1} parent=0 // loop_exit
    _

</llo_original>
